<compile_context>
chip_gen: v7x
topology: tpu7x:2x2x1
jax: 0.10.0
libtpu: 0.0.40
codegen_flags: <defaults>
</compile_context>

<pallas_src>
import functools

import jax
import jax.numpy as jnp
import numpy as np
from jax.experimental import pallas as pl
from jax.experimental.pallas import tpu as pltpu

_LANE = 128
_TILE_ALIGN = 512        # batch-lane granularity (multiple of the 128-lane vreg)
_MAX_TILE_B = 32768      # 32768 lanes -> 1 MiB sublane-padded input buffer/step
_SINGLE_STEP_MAX = 4096  # below this, a single grid step + minimal padding


def _round_up(x, m):
    return ((x + m - 1) // m) * m


def _pick_tile(B):
    """Pick the batch-lane tile (static, B is a Python int under jit)."""
    bp_min = _round_up(B, _TILE_ALIGN)
    if bp_min <= _SINGLE_STEP_MAX:
        return bp_min                      # tiny problem: one step, tiny pad
    # Aim for >= 2 grid steps (v7x megacore) but cap the tile so per-buffer
    # VMEM stays ~1 MiB (amortizing the ~0.35 us/step overhead is the goal;
    # VMEM is nowhere near binding at this size on v5e/v6e/v7x).
    half = _round_up((bp_min + 1) // 2, _TILE_ALIGN)
    return min(_MAX_TILE_B, half)


def _objective_kernel(scal_ref, x_ref, *rest, add_noise):
    # scal_ref: SMEM (3,) f32 = [noise_std, noise_mean, sign]
    # x_ref:    VMEM (d, TB) f32 block -- batch on lanes, dims on sublanes.
    # rest:     (eps_ref, o_ref) if add_noise else (o_ref,)
    if add_noise:
        eps_ref, o_ref = rest
    else:
        (o_ref,) = rest

    x = x_ref[...]                                   # (d, TB), already f32
    # Styblinski–Tang with the global 0.5 folded into the Horner constants.
    p = x * (x * (0.5 * (x * x) - 8.0) + 2.5)
    fx = jnp.sum(p, axis=0, keepdims=True)           # (1, TB) sublane reduce

    if add_noise:
        fx = fx + scal_ref[0] * eps_ref[...] + scal_ref[1]

    o_ref[...] = scal_ref[2] * fx                    # sign: +1.0 / -1.0


@functools.partial(jax.jit, static_argnames=("add_noise",))
def _forward_impl(X2d, scalars, key, *, add_noise):
    """Single fused executable: pad+transpose, (noise), kernel, output slice."""
    B, d = X2d.shape
    tb = _pick_tile(B)                    # static under jit
    Bp = _round_up(B, tb)
    grid = (Bp // tb,)

    # (B, d) -> (d, Bp): batch on the lane axis, lane-dense compute & stores.
    # Under jit this transpose+pad fuses into a single prep pass feeding the
    # pallas_call (and is a no-op pad when B is already tile-aligned).
    xt = jnp.pad(X2d.T, ((0, 0), (0, Bp - B)))

    in_specs = [
        pl.BlockSpec(memory_space=pltpu.MemorySpace.SMEM),   # scalars
        pl.BlockSpec((d, tb), lambda i: (0, i)),             # x (transposed)
    ]
    operands = [scalars, xt]
    if add_noise:
        eps = jax.random.normal(key, (1, Bp), dtype=jnp.float32)
        in_specs.append(pl.BlockSpec((1, tb), lambda i: (0, i)))
        operands.append(eps)

    out = pl.pallas_call(
        functools.partial(_objective_kernel, add_noise=add_noise),
        out_shape=jax.ShapeDtypeStruct((1, Bp), jnp.float32),
        grid=grid,
        in_specs=in_specs,
        out_specs=pl.BlockSpec((1, tb), lambda i: (0, i)),
        compiler_params=pltpu.CompilerParams(
            dimension_semantics=("parallel",)),
    )(*operands)

    # Padded columns hold f(0)(+noise) garbage; slice them off before anything
    # downstream can see them.
    return out[0, :B][:, None]            # (B, 1)


class ObjectiveFunction:
    """JAX/Pallas port of the PyTorch ObjectiveFunction, with evaluate_true()
    instantiated as the Styblinski–Tang test function."""

    def __init__(self, dims, low, high, noise_mean=0.0, noise_variance=None,
                 random_state=None, negate=False):
        self.dims = dims
        self.low = None if low is None else jnp.asarray(low, jnp.float32)
        self.high = None if high is None else jnp.asarray(high, jnp.float32)
        self.noise_mean = float(noise_mean)
        self.noise_variance = noise_variance
        # Unlike the torch original (which sets noise_std=None for variance 0
        # and would then crash), zero variance keeps std=0.0 so the mean offset
        # is still applied.
        self.noise_std = (float(np.sqrt(noise_variance))
                          if noise_variance is not None else 0.0)
        self.negate = bool(negate)
        self.random_state = 0 if random_state is None else int(random_state)

        self._key = jax.random.PRNGKey(self.random_state)
        self._dummy_key = jax.random.PRNGKey(0)
        sign = -1.0 if self.negate else 1.0
        # SMEM scalars: [noise_std, noise_mean, sign] -- value changes never
        # retrace/recompile the kernel.
        self._scalars_fwd = jnp.array([self.noise_std, self.noise_mean, sign],
                                      jnp.float32)
        self._scalars_true = jnp.array([0.0, 0.0, 1.0], jnp.float32)

    @staticmethod
    def _as_2d(X):
        X = jnp.asarray(X, dtype=jnp.float32)
        batched = X.ndim > 1
        return (X if batched else X[None, :]), batched

    def forward(self, X, noise=True):
        X2d, batched = self._as_2d(X)
        add_noise = bool(noise) and (self.noise_variance is not None)
        if add_noise:
            self._key, sub = jax.random.split(self._key)   # fresh draw per call
        else:
            sub = self._dummy_key
        f = _forward_impl(X2d, self._scalars_fwd, sub, add_noise=add_noise)
        return f if batched else f[0]

    def forward_true(self, X):
        X2d, batched = self._as_2d(X)
        f = _forward_impl(X2d, self._scalars_true, self._dummy_key,
                          add_noise=False)
        return f if batched else f[0]

    # TODO(synk): backward() (autograd gradients w.r.t. X) is not implemented
    # as a Pallas kernel; only the forward pass is ported.


def _reference_true(X2d):
    x = jnp.asarray(X2d, jnp.float32)
    return jnp.sum(x * (x * (0.5 * (x * x) - 8.0) + 2.5),
                   axis=-1, keepdims=True)


if __name__ == "__main__":
    dims, batch = 4, 8
    key = jax.random.PRNGKey(0)
    low = -5.0 * jnp.ones((dims,), jnp.float32)
    high = 5.0 * jnp.ones((dims,), jnp.float32)

    obj = ObjectiveFunction(dims=dims, low=low, high=high,
                            noise_mean=0.0, noise_variance=0.01,
                            random_state=7, negate=True)

    X = jax.random.uniform(key, (batch, dims), dtype=jnp.float32,
                           minval=-5.0, maxval=5.0)
    ref = np.asarray(_reference_true(X))                    # un-negated truth

    # forward_true: no noise, no negation (matches the torch module).
    f_true = jax.block_until_ready(obj.forward_true(X))
    assert f_true.shape == (batch, 1)
    np.testing.assert_allclose(np.asarray(f_true), ref, rtol=1e-5, atol=1e-4)

    # forward(noise=False): negation only.
    f_nf = jax.block_until_ready(obj.forward(X, noise=False))
    assert f_nf.shape == (batch, 1)
    np.testing.assert_allclose(np.asarray(f_nf), -ref, rtol=1e-5, atol=1e-4)

    # forward(noise=True): first noisy call uses the first split of
    # PRNGKey(random_state); replay that draw for an exact check.
    k = jax.random.PRNGKey(obj.random_state)
    k, sub = jax.random.split(k)
    tb = _pick_tile(batch)
    Bp = _round_up(batch, tb)
    eps = np.asarray(jax.random.normal(sub, (1, Bp), jnp.float32))[0, :batch][:, None]
    f_noisy = jax.block_until_ready(obj.forward(X, noise=True))
    ref_noisy = -(ref + obj.noise_std * eps + obj.noise_mean)
    np.testing.assert_allclose(np.asarray(f_noisy), ref_noisy,
                               rtol=1e-5, atol=1e-4)

    # A second noisy call draws fresh noise (torch.randn_like semantics).
    f_noisy2 = jax.block_until_ready(obj.forward(X, noise=True))
    assert not np.allclose(np.asarray(f_noisy), np.asarray(f_noisy2))

    # Un-batched (d,) input path -> (1,) output.
    f1 = jax.block_until_ready(obj.forward_true(X[0]))
    assert f1.shape == (1,)
    np.testing.assert_allclose(np.asarray(f1), ref[0], rtol=1e-5, atol=1e-4)

    print("KERNEL_OK")
</pallas_src>

<mosaic_0001>
module attributes {stable_mosaic.version = 11 : i64} {
  func.func @_objective_kernel(%arg0: i32, %arg1: memref<3xf32, #tpu.memory_space<smem>>, %arg2: memref<4x512xf32, #tpu.memory_space<vmem>>, %arg3: memref<1x512xf32, #tpu.memory_space<vmem>>) attributes {dimension_semantics = [#tpu.dimension_semantics<parallel>], iteration_bounds = array<i64: 1>, scalar_prefetch = 0 : i64, scratch_operands = 0 : i64, tpu.core_type = #tpu.core_type<tc>, window_params = [{transform_indices = @transform_0, window_bounds = array<i64: 3>}, {transform_indices = @transform_1, window_bounds = array<i64: 4, 512>}, {transform_indices = @transform_2, window_bounds = array<i64: 1, 512>}]} {
    %c0 = arith.constant 0 : index
    %c0_0 = arith.constant 0 : index
    %0 = vector.load %arg2[%c0, %c0_0] : memref<4x512xf32, #tpu.memory_space<vmem>>, vector<4x512xf32>
    %1 = arith.mulf %0, %0 : vector<4x512xf32>
    %cst = arith.constant 5.000000e-01 : f32
    %2 = vector.broadcast %cst : f32 to vector<4x512xf32>
    %3 = arith.mulf %2, %1 : vector<4x512xf32>
    %cst_1 = arith.constant 8.000000e+00 : f32
    %4 = vector.broadcast %cst_1 : f32 to vector<4x512xf32>
    %5 = arith.subf %3, %4 : vector<4x512xf32>
    %6 = arith.mulf %0, %5 : vector<4x512xf32>
    %cst_2 = arith.constant 2.500000e+00 : f32
    %7 = vector.broadcast %cst_2 : f32 to vector<4x512xf32>
    %8 = arith.addf %6, %7 : vector<4x512xf32>
    %9 = arith.mulf %0, %8 : vector<4x512xf32>
    %cst_3 = arith.constant dense<0.000000e+00> : vector<512xf32>
    %10 = vector.multi_reduction <add>, %9, %cst_3 [0] : vector<4x512xf32> to vector<512xf32>
    %11 = vector.shape_cast %10 : vector<512xf32> to vector<1x512xf32>
    %c2 = arith.constant 2 : index
    %12 = memref.load %arg1[%c2] : memref<3xf32, #tpu.memory_space<smem>>
    %13 = vector.broadcast %12 : f32 to vector<1x512xf32>
    %14 = arith.mulf %13, %11 : vector<1x512xf32>
    %c0_4 = arith.constant 0 : index
    %c0_5 = arith.constant 0 : index
    %15 = vector.load %arg3[%c0_4, %c0_5] : memref<1x512xf32, #tpu.memory_space<vmem>>, vector<1x512xf32>
    tpu.vector_store %arg3[%c0_4, %c0_5], %14 {strides = array<i32>} : memref<1x512xf32, #tpu.memory_space<vmem>>, vector<1x512xf32>,
    return
  }
  func.func @transform_0(%arg0: i32) -> i32 {
    %c0_i32 = arith.constant 0 : i32
    %c0_i32_0 = arith.constant 0 : i32
    return %c0_i32 : i32
  }
  func.func @transform_1(%arg0: i32) -> (i32, i32) {
    %c0_i32 = arith.constant 0 : i32
    %c0_i32_0 = arith.constant 0 : i32
    return %c0_i32, %arg0 : i32, i32
  }
  func.func @transform_2(%arg0: i32) -> (i32, i32) {
    %c0_i32 = arith.constant 0 : i32
    %c0_i32_0 = arith.constant 0 : i32
    return %c0_i32, %arg0 : i32, i32
  }
}

</mosaic_0001>

<llo_original>
// kernel: _forward_impl.1
$region0: #{_forward_impl.1}
  #allocation0 [shape = 'u32[]', space=smem, size = 0x4, offset = 0x4, fixed_abs, tag = 'smem constant byte address 0x4 - core index']
  #allocation1 [shape = 'u32[144,128]{1,0:T(1,128)}', space=vmem, size = 0x12000, scoped, tag = 'internal scratch']
  %s0 = inlined_call_operand.vmem [shape: f32[3], index: 0, kind: input, shape index: {}]
  %s1 = inlined_call_operand.vmem [shape: f32[4,512], index: 1, kind: input, shape index: {}]
  %s2 = inlined_call_operand.vmem [shape: f32[1,512], index: 2, kind: output, shape index: {}]
  %s3 = sld [smem:[#allocation0]]
  $region22: #{_forward_impl.1} parent=0
    _
  %s5 = ssub.s32 1, %s3
  %s6 = scalar_select 0, %s5, %s3
  $region1: #{_forward_impl.1} parent=0
    #allocation2 [shape = 'u8[512]{0}', space=smem, size = 0x200, scoped, tag = 'input window, operand 0, single buffered']
    #allocation3 [shape = 's32[1]{0}', space=sflag, size = 0x4, scoped, tag = 'scoped memory for _forward_impl.1']
    %7 = vsyncpa [#allocation3], 0
    // Predicated region
    $region2: #{_forward_impl.1} parent=1 // pred_check
      _
    $region3: #{_forward_impl.1} parent=1 // pred_check_branch
      %9 = sbr.rel (0) target = $region5
    $region4: #{_forward_impl.1} parent=1 // pred_region
      %s11 = ssub.s32 16, 16
      %12 = vsyncadd [#allocation3], %s11
      %s14 = sshll.u32 %s0, 4
      %s15 = int_to_ptr.vmem [resolvable:$true] %s14
      %17 = dma.vmem_to_smem %s15, 16, [#allocation2], [#allocation3]
    $region5: #{_forward_impl.1} parent=1 // pred_fallthru
      _
    // Predicated region
    $region6: #{_forward_impl.1} parent=1 // pred_check
      _
    $region7: #{_forward_impl.1} parent=1 // pred_check_branch
      %19 = sbr.rel (0) target = $region9
    $region8: #{_forward_impl.1} parent=1 // pred_region
      _
    $region9: #{_forward_impl.1} parent=1 // pred_fallthru
      _
    // Predicated region
    $region10: #{_forward_impl.1} parent=1 // pred_check
      _
    $region11: #{_forward_impl.1} parent=1 // pred_check_branch
      %21 = sbr.rel (0) target = $region13
    $region12: #{_forward_impl.1} parent=1 // pred_region
      %22 = dma.done [#allocation3], 16
    $region13: #{_forward_impl.1} parent=1 // pred_fallthru
      _
    %23 = sfence
    %v24 = vld [vmem:[%s1] sm:$0xff]
    %v25 = vld [vmem:[%s1 + $0x8] sm:$0xff]
    %v26 = vmul.f32 %v24, %v24
    %v27 = vmul.f32 %v25, %v25
    %v28 = vmul.f32 %v26, 0.5
    %v29 = vmul.f32 %v27, 0.5
    %v30 = vsub.f32 %v28, 8.0
    %v31 = vsub.f32 %v29, 8.0
    %v32 = vmul.f32 %v24, %v30
    %v33 = vmul.f32 %v25, %v31
    %v34 = vadd.f32 %v32, 2.5
    %v35 = vadd.f32 %v33, 2.5
    %v36 = vmul.f32 %v24, %v34
    %v37 = vmul.f32 %v25, %v35
    %v40 = vcombine.high %v36, %v36
    %v41 = vcombine.high %v37, %v37
    %vm44 = vcmask 1043456
    %v45 = vsel %vm44, %v36, 0.0
    %v46 = vrot.slane %v45, 4
    %v47 = vadd.f32 %v45, %v46
    %v48 = vrot.slane %v47, 2
    %v49 = vadd.f32 %v47, %v48
    %v50 = vrot.slane %v49, 1
    %v51 = vadd.f32 %v49, %v50
    %v52 = vsel %vm44, %v40, 0.0
    %v53 = vrot.slane %v52, 4
    %v54 = vadd.f32 %v52, %v53
    %v55 = vrot.slane %v54, 2
    %v56 = vadd.f32 %v54, %v55
    %v57 = vrot.slane %v56, 1
    %v58 = vadd.f32 %v56, %v57
    %v59 = vsel %vm44, %v37, 0.0
    %v60 = vrot.slane %v59, 4
    %v61 = vadd.f32 %v59, %v60
    %v62 = vrot.slane %v61, 2
    %v63 = vadd.f32 %v61, %v62
    %v64 = vrot.slane %v63, 1
    %v65 = vadd.f32 %v63, %v64
    %v66 = vsel %vm44, %v41, 0.0
    %v67 = vrot.slane %v66, 4
    %v68 = vadd.f32 %v66, %v67
    %v69 = vrot.slane %v68, 2
    %v70 = vadd.f32 %v68, %v69
    %v71 = vrot.slane %v70, 1
    %v72 = vadd.f32 %v70, %v71
    %s73 = sld [smem:[#allocation2 + $0x2]]
    %v74 = vstv %s73
    %v75 = vmul.f32 %v74, %v51
    %v76 = vmul.f32 %v74, %v58
    %v77 = vmul.f32 %v74, %v65
    %v78 = vmul.f32 %v74, %v72
    %v83 = vcombine.low %v75, %v76
    %v84 = vcombine.low %v77, %v78
    %v86 = vunpack.c.l.s4 1966171168
    %v87 = vunpack.c.0.s8 %v86
    %v88 = vlaneseq
    %v89 = vshrl.u32 %v88, 7
    %v90 = vsub.s32 %v87, %v89
    %v91 = vrot.slane %v83, %v90
    %v93 = vunpack.c.l.s4 1966171168
    %v94 = vunpack.c.0.s8 %v93
    %v95 = vlaneseq
    %v96 = vshrl.u32 %v95, 7
    %v97 = vsub.s32 %v94, %v96
    %v98 = vrot.slane %v84, %v97
    %v99 = vcombine.low %v91, %v98
    %v101 = vunpack.c.l.s4 1966171168
    %v102 = vunpack.c.0.s8 %v101
    %v103 = vlaneseq
    %v104 = vshrl.u32 %v103, 7
    %v105 = vsub.s32 %v102, %v104
    %v106 = vrot.slane %v99, %v105
    %v108 = vlaneseq
    %vm109 = vcmp.ge.s32.totalorder %v108, 0
    %vm110 = vcmp.lt.s32.totalorder %v108, 512
    %vm111 = vmand %vm109, %vm110
    %112 = vst.msk [vmem:[%s2] sm:$0xf] %vm111, %v106
    // Predicated region
    $region14: #{_forward_impl.1} parent=1 // pred_check
      _
    $region15: #{_forward_impl.1} parent=1 // pred_check_branch
      %114 = sbr.rel (0) target = $region17
    $region16: #{_forward_impl.1} parent=1 // pred_region
      _
    $region17: #{_forward_impl.1} parent=1 // pred_fallthru
      _
    // Predicated region
    $region18: #{_forward_impl.1} parent=1 // pred_check
      _
    $region19: #{_forward_impl.1} parent=1 // pred_check_branch
      %116 = sbr.rel (0) target = $region21
    $region20: #{_forward_impl.1} parent=1 // pred_region
      _
    $region21: #{_forward_impl.1} parent=1 // pred_fallthru
      _
    %117 = vsyncpa [#allocation3], 1

</llo_original>
